<compile_context>
chip_gen: v7x
topology: tpu7x:2x2x1
jax: 0.10.0
libtpu: 0.0.40
codegen_flags: <defaults>
</compile_context>

<pallas_src>
import functools

import jax
import jax.numpy as jnp
from jax import lax
from jax.experimental import pallas as pl
from jax.experimental.pallas import tpu as pltpu


def _round_up(x: int, m: int) -> int:
    return ((x + m - 1) // m) * m


def _action_loss_kernel(scores_ref, label_ref, out_ref, acc_ref, *,
                        B, C, TB, C_pad, inv_n):
    i = pl.program_id(0)

    @pl.when(i == 0)
    def _():
        acc_ref[0, 0] = jnp.float32(0.0)

    scores = scores_ref[...].astype(jnp.float32)   # (TB, C_pad)
    label = label_ref[...].astype(jnp.float32)     # (TB, C_pad)

    # Validity masks for padded rows (>= B) and padded classes (>= C).
    row_ids = i * TB + lax.broadcasted_iota(jnp.int32, (TB, C_pad), 0)
    col_ids = lax.broadcasted_iota(jnp.int32, (TB, C_pad), 1)
    valid = (row_ids < B) & (col_ids < C)

    # label = label / sum(label, dim=1, keepdim=True)
    # Padded label columns are zero, so the row sum is already exact.
    row_sum = jnp.sum(label, axis=1, keepdims=True)            # (TB, 1)
    row_valid = (i * TB + lax.broadcasted_iota(jnp.int32, (TB, 1), 0)) < B
    # Guard padded rows (all-zero labels) against 0/0 -> NaN; real zero-sum
    # rows keep PyTorch's NaN behavior because they stay un-guarded.
    safe_row_sum = jnp.where(row_valid, row_sum, jnp.float32(1.0))
    label = label * pl.reciprocal(safe_row_sum, approx=False)

    # nn.BCELoss element term with PyTorch's -100 clamp, folded to save a mul:
    #   -(y*log_p + (1-y)*log_1mp) == -(y*(log_p - log_1mp) + log_1mp)
    log_p = jnp.maximum(jnp.log(scores), -100.0)
    log_1mp = jnp.maximum(jnp.log(1.0 - scores), -100.0)
    elem = -(label * (log_p - log_1mp) + log_1mp)
    elem = jnp.where(valid, elem, jnp.float32(0.0))

    acc_ref[0, 0] = acc_ref[0, 0] + jnp.sum(elem)

    @pl.when(i == pl.num_programs(0) - 1)
    def _():
        # Mean over the TRUE number of elements (static constant reciprocal).
        out_ref[0, 0] = acc_ref[0, 0] * jnp.float32(inv_n)


def action_loss(video_scores: jax.Array, label: jax.Array) -> jax.Array:
    """Pallas implementation of ActionLoss.forward. Returns a scalar f32."""
    assert video_scores.shape == label.shape and video_scores.ndim == 2
    B, C = video_scores.shape

    # Lane-dense class dim.
    C_pad = _round_up(C, 128)
    # Row tile: multiple of 8, <= 512, and per-input tile <= ~2 MiB so that
    # 2 inputs x 2 pipeline buffers stay far below v7x's 64 MiB VMEM.
    tb_cap = max(8, (((2 * 1024 * 1024) // (C_pad * 4)) // 8) * 8)
    TB = min(512, tb_cap, _round_up(B, 8))
    B_pad = _round_up(B, TB)
    grid = (B_pad // TB,)

    # Pad scores with 0.5 (finite logs) and labels with 0; padding is masked
    # out inside the kernel.
    scores_p = jnp.pad(video_scores.astype(jnp.float32),
                       ((0, B_pad - B), (0, C_pad - C)), constant_values=0.5)
    label_p = jnp.pad(label.astype(jnp.float32),
                      ((0, B_pad - B), (0, C_pad - C)), constant_values=0.0)

    kernel = functools.partial(
        _action_loss_kernel,
        B=B, C=C, TB=TB, C_pad=C_pad, inv_n=1.0 / float(B * C),
    )

    out = pl.pallas_call(
        kernel,
        out_shape=jax.ShapeDtypeStruct((1, 1), jnp.float32),
        grid_spec=pltpu.PrefetchScalarGridSpec(
            num_scalar_prefetch=0,
            grid=grid,
            in_specs=[
                pl.BlockSpec((TB, C_pad), lambda i: (i, 0)),
                pl.BlockSpec((TB, C_pad), lambda i: (i, 0)),
            ],
            out_specs=pl.BlockSpec((1, 1), lambda i: (0, 0),
                                   memory_space=pltpu.SMEM),
            scratch_shapes=[pltpu.SMEM((1, 1), jnp.float32)],
        ),
        compiler_params=pltpu.CompilerParams(
            # Output/accumulator is revisited across the batch-tile axis.
            dimension_semantics=("arbitrary",),
            vmem_limit_bytes=32 * 1024 * 1024,
        ),
    )(scores_p, label_p)
    return out[0, 0]


def _reference(video_scores, label):
    label = label / jnp.sum(label, axis=1, keepdims=True)
    log_p = jnp.maximum(jnp.log(video_scores), -100.0)
    log_1mp = jnp.maximum(jnp.log(1.0 - video_scores), -100.0)
    return jnp.mean(-(label * log_p + (1.0 - label) * log_1mp))


if __name__ == "__main__":
    key = jax.random.PRNGKey(0)

    # (B, C): small primary case + cases exercising lane/row padding and a
    # multi-step grid.
    shapes = [(8, 32), (37, 200), (1029, 200)]

    ok = True
    for B, C in shapes:
        key, k_scores, k_label = jax.random.split(key, 3)

        # video_scores: probabilities in (0, 1) (BCELoss expects sigmoid outputs)
        video_scores = jax.nn.sigmoid(
            jax.random.normal(k_scores, (B, C), dtype=jnp.float32))

        # label: multi-hot ground truth; at least one positive per row
        label = (jax.random.uniform(k_label, (B, C)) < 0.3).astype(jnp.float32)
        label = label.at[:, 0].set(1.0)

        loss = action_loss(video_scores, label)
        jax.block_until_ready(loss)

        ref = _reference(video_scores, label)
        if not jnp.allclose(loss, ref, rtol=1e-5, atol=1e-6):
            ok = False
            print("MISMATCH", (B, C), float(loss), float(ref))

    assert ok
    print("KERNEL_OK")
</pallas_src>

<mosaic_0001>
module attributes {stable_mosaic.version = 11 : i64} {
  func.func @_action_loss_kernel(%arg0: i32, %arg1: memref<8x128xf32, #tpu.memory_space<vmem>>, %arg2: memref<8x128xf32, #tpu.memory_space<vmem>>, %arg3: memref<1x1xf32, #tpu.memory_space<smem>>, %arg4: memref<1x1xf32, #tpu.memory_space<smem>>) attributes {dimension_semantics = [#tpu.dimension_semantics<arbitrary>], iteration_bounds = array<i64: 1>, scalar_prefetch = 0 : i64, scratch_operands = 1 : i64, tpu.core_type = #tpu.core_type<tc>, window_params = [{transform_indices = @transform_0, window_bounds = array<i64: 8, 128>}, {transform_indices = @transform_1, window_bounds = array<i64: 8, 128>}, {transform_indices = @transform_2, window_bounds = array<i64: 1, 1>}]} {
    %c0_i32 = arith.constant 0 : i32
    %0 = arith.cmpi eq, %arg0, %c0_i32 : i32
    %1 = arith.extui %0 : i1 to i32
    %c0_i32_0 = arith.constant 0 : i32
    %2 = arith.cmpi ne, %1, %c0_i32_0 : i32
    scf.if %2 {
      %cst_20 = arith.constant 0.000000e+00 : f32
      %c0_21 = arith.constant 0 : index
      %c0_22 = arith.constant 0 : index
      %53 = memref.load %arg4[%c0_21, %c0_22] : memref<1x1xf32, #tpu.memory_space<smem>>
      memref.store %cst_20, %arg4[%c0_21, %c0_22] : memref<1x1xf32, #tpu.memory_space<smem>>
    } else {
    }
    %c0 = arith.constant 0 : index
    %c0_1 = arith.constant 0 : index
    %3 = vector.load %arg1[%c0, %c0_1] : memref<8x128xf32, #tpu.memory_space<vmem>>, vector<8x128xf32>
    %c0_2 = arith.constant 0 : index
    %c0_3 = arith.constant 0 : index
    %4 = vector.load %arg2[%c0_2, %c0_3] : memref<8x128xf32, #tpu.memory_space<vmem>>, vector<8x128xf32>
    %c8_i32 = arith.constant 8 : i32
    %5 = arith.muli %arg0, %c8_i32 : i32
    %6 = tpu.iota {dimensions = array<i32: 0>} : vector<8x128xi32>
    %7 = vector.broadcast %5 : i32 to vector<8x128xi32>
    %8 = arith.addi %7, %6 : vector<8x128xi32>
    %9 = tpu.iota {dimensions = array<i32: 1>} : vector<8x128xi32>
    %c8_i32_4 = arith.constant 8 : i32
    %10 = vector.broadcast %c8_i32_4 : i32 to vector<8x128xi32>
    %11 = arith.cmpi slt, %8, %10 : vector<8x128xi32>
    %c32_i32 = arith.constant 32 : i32
    %12 = vector.broadcast %c32_i32 : i32 to vector<8x128xi32>
    %13 = arith.cmpi slt, %9, %12 : vector<8x128xi32>
    %14 = arith.andi %11, %13 : vector<8x128xi1>
    %cst = arith.constant dense<0.000000e+00> : vector<8xf32>
    %15 = vector.multi_reduction <add>, %4, %cst [1] : vector<8x128xf32> to vector<8xf32>
    %16 = vector.shape_cast %15 : vector<8xf32> to vector<8x1xf32>
    %c8_i32_5 = arith.constant 8 : i32
    %17 = arith.muli %arg0, %c8_i32_5 : i32
    %18 = tpu.iota {dimensions = array<i32: 0>} : vector<8x1xi32>
    %19 = vector.broadcast %17 : i32 to vector<8x1xi32>
    %20 = arith.addi %19, %18 : vector<8x1xi32>
    %c8_i32_6 = arith.constant 8 : i32
    %21 = vector.broadcast %c8_i32_6 : i32 to vector<8x1xi32>
    %22 = arith.cmpi slt, %20, %21 : vector<8x1xi32>
    %cst_7 = arith.constant 1.000000e+00 : f32
    %23 = vector.broadcast %cst_7 : f32 to vector<8x1xf32>
    %24 = arith.select %22, %16, %23 : vector<8x1xi1>, vector<8x1xf32>
    %25 = tpu.reciprocal %24 : vector<8x1xf32> -> vector<8x1xf32>
    %26 = vector.broadcast %25 : vector<8x1xf32> to vector<8x128xf32>
    %27 = arith.mulf %4, %26 : vector<8x128xf32>
    %28 = math.log %3 : vector<8x128xf32>
    %cst_8 = arith.constant -1.000000e+02 : f32
    %29 = vector.broadcast %cst_8 : f32 to vector<8x128xf32>
    %30 = arith.maximumf %28, %29 : vector<8x128xf32>
    %cst_9 = arith.constant 1.000000e+00 : f32
    %31 = vector.broadcast %cst_9 : f32 to vector<8x128xf32>
    %32 = arith.subf %31, %3 : vector<8x128xf32>
    %33 = math.log %32 : vector<8x128xf32>
    %cst_10 = arith.constant -1.000000e+02 : f32
    %34 = vector.broadcast %cst_10 : f32 to vector<8x128xf32>
    %35 = arith.maximumf %33, %34 : vector<8x128xf32>
    %36 = arith.subf %30, %35 : vector<8x128xf32>
    %37 = arith.mulf %27, %36 : vector<8x128xf32>
    %38 = arith.addf %37, %35 : vector<8x128xf32>
    %cst_11 = arith.constant 0.000000e+00 : f32
    %39 = vector.broadcast %cst_11 : f32 to vector<8x128xf32>
    %40 = arith.subf %39, %38 : vector<8x128xf32>
    %cst_12 = arith.constant 0.000000e+00 : f32
    %41 = vector.broadcast %cst_12 : f32 to vector<8x128xf32>
    %42 = arith.select %14, %40, %41 : vector<8x128xi1>, vector<8x128xf32>
    %c0_13 = arith.constant 0 : index
    %c0_14 = arith.constant 0 : index
    %43 = memref.load %arg4[%c0_13, %c0_14] : memref<1x1xf32, #tpu.memory_space<smem>>
    %44 = vector.shape_cast %42 : vector<8x128xf32> to vector<1x8x128xf32>
    %cst_15 = arith.constant dense<0.000000e+00> : vector<1xf32>
    %45 = vector.multi_reduction <add>, %44, %cst_15 [1, 2] : vector<1x8x128xf32> to vector<1xf32>
    %46 = vector.shape_cast %45 : vector<1xf32> to vector<1x1x1xf32>
    %47 = vector.extract %46[0, 0, 0] : f32 from vector<1x1x1xf32>
    %48 = arith.addf %43, %47 : f32
    %c0_16 = arith.constant 0 : index
    %c0_17 = arith.constant 0 : index
    %49 = memref.load %arg4[%c0_16, %c0_17] : memref<1x1xf32, #tpu.memory_space<smem>>
    memref.store %48, %arg4[%c0_16, %c0_17] : memref<1x1xf32, #tpu.memory_space<smem>>
    %c0_i32_18 = arith.constant 0 : i32
    %50 = arith.cmpi eq, %arg0, %c0_i32_18 : i32
    %51 = arith.extui %50 : i1 to i32
    %c0_i32_19 = arith.constant 0 : i32
    %52 = arith.cmpi ne, %51, %c0_i32_19 : i32
    scf.if %52 {
      %c0_20 = arith.constant 0 : index
      %c0_21 = arith.constant 0 : index
      %53 = memref.load %arg4[%c0_20, %c0_21] : memref<1x1xf32, #tpu.memory_space<smem>>
      %cst_22 = arith.constant 3.906250e-03 : f32
      %54 = arith.mulf %53, %cst_22 : f32
      %c0_23 = arith.constant 0 : index
      %c0_24 = arith.constant 0 : index
      %55 = memref.load %arg3[%c0_23, %c0_24] : memref<1x1xf32, #tpu.memory_space<smem>>
      memref.store %54, %arg3[%c0_23, %c0_24] : memref<1x1xf32, #tpu.memory_space<smem>>
    } else {
    }
    return
  }
  func.func @transform_0(%arg0: i32) -> (i32, i32) {
    %c0_i32 = arith.constant 0 : i32
    %c0_i32_0 = arith.constant 0 : i32
    return %arg0, %c0_i32 : i32, i32
  }
  func.func @transform_1(%arg0: i32) -> (i32, i32) {
    %c0_i32 = arith.constant 0 : i32
    %c0_i32_0 = arith.constant 0 : i32
    return %arg0, %c0_i32 : i32, i32
  }
  func.func @transform_2(%arg0: i32) -> (i32, i32) {
    %c0_i32 = arith.constant 0 : i32
    %c0_i32_0 = arith.constant 0 : i32
    %c0_i32_1 = arith.constant 0 : i32
    return %c0_i32, %c0_i32_0 : i32, i32
  }
}

</mosaic_0001>

<llo_original>
// kernel: tpu_custom_call.1
$region0: #{tpu_custom_call.1}
  #allocation0 [shape = 'u32[]', space=smem, size = 0x4, offset = 0x4, fixed_abs, tag = 'smem constant byte address 0x4 - core index']
  #allocation1 [shape = 'u32[144,128]{1,0:T(1,128)}', space=vmem, size = 0x12000, scoped, tag = 'internal scratch']
  #allocation2 [shape = 'f32[1,1]{1,0:T(1,128)}', space=smem, size = 0x200, scoped, tag = 'scratch operand']
  %s0 = inlined_call_operand.hbm [shape: f32[8,128], index: 0, kind: input, shape index: {}]
  %s1 = inlined_call_operand.hbm [shape: f32[8,128], index: 1, kind: input, shape index: {}]
  %s2 = inlined_call_operand.hbm [shape: f32[1,1], index: 2, kind: output, shape index: {}]
  %s3 = sld [smem:[#allocation0]]
  $region34: #{tpu_custom_call.1} parent=0
    _
  %s5 = ssub.s32 1, %s3
  %s6 = scalar_select 0, %s5, %s3
  $region1: #{tpu_custom_call.1} parent=0
    #allocation3 [shape = 'u8[4096]{0}', space=vmem, size = 0x1000, scoped, tag = 'input window, operand 0, single buffered']
    #allocation4 [shape = 's32[1]{0}', space=sflag, size = 0x4, scoped, tag = 'scoped memory for tpu_custom_call.1']
    #allocation5 [shape = 's32[1]{0}', space=sflag, size = 0x4, scoped, tag = 'scoped memory for tpu_custom_call.1']
    #allocation6 [shape = 'u8[4096]{0}', space=vmem, size = 0x1000, scoped, tag = 'input window, operand 1, single buffered']
    #allocation7 [shape = 's32[1]{0}', space=sflag, size = 0x4, scoped, tag = 'scoped memory for tpu_custom_call.1']
    #allocation8 [shape = 'u8[512]{0}', space=smem, size = 0x200, scoped, tag = 'output window, operand 0, single buffered']
    %7 = vsyncpa [#allocation4], 0
    %8 = vsyncpa [#allocation7], 0
    %9 = vsyncpa [#allocation5], 0
    // Predicated region
    $region2: #{tpu_custom_call.1} parent=1 // pred_check
      _
    $region3: #{tpu_custom_call.1} parent=1 // pred_check_branch
      %11 = sbr.rel (0) target = $region5
    $region4: #{tpu_custom_call.1} parent=1 // pred_region
      %s13 = ssub.s32 128, 128
      %14 = vsyncadd [#allocation4], %s13
      %s16 = sshll.u32 [#allocation3], 4
      %s17 = int_to_ptr.vmem [resolvable:$true] %s16
      %19 = dma.hbm_to_vmem [thread:$0]  %s0, 128, %s17, [#allocation4]
    $region5: #{tpu_custom_call.1} parent=1 // pred_fallthru
      _
    // Predicated region
    $region6: #{tpu_custom_call.1} parent=1 // pred_check
      _
    $region7: #{tpu_custom_call.1} parent=1 // pred_check_branch
      %21 = sbr.rel (0) target = $region9
    $region8: #{tpu_custom_call.1} parent=1 // pred_region
      %s23 = ssub.s32 128, 128
      %24 = vsyncadd [#allocation7], %s23
      %s26 = sshll.u32 [#allocation6], 4
      %s27 = int_to_ptr.vmem [resolvable:$true] %s26
      %29 = dma.hbm_to_vmem [thread:$0]  %s1, 128, %s27, [#allocation7]
    $region9: #{tpu_custom_call.1} parent=1 // pred_fallthru
      _
    // Predicated region
    $region10: #{tpu_custom_call.1} parent=1 // pred_check
      _
    $region11: #{tpu_custom_call.1} parent=1 // pred_check_branch
      %31 = sbr.rel (0) target = $region13
    $region12: #{tpu_custom_call.1} parent=1 // pred_region
      %32 = dma.done [#allocation4], 128
    $region13: #{tpu_custom_call.1} parent=1 // pred_fallthru
      _
    // Predicated region
    $region14: #{tpu_custom_call.1} parent=1 // pred_check
      _
    $region15: #{tpu_custom_call.1} parent=1 // pred_check_branch
      %34 = sbr.rel (0) target = $region17
    $region16: #{tpu_custom_call.1} parent=1 // pred_region
      %35 = dma.done [#allocation7], 128
    $region17: #{tpu_custom_call.1} parent=1 // pred_fallthru
      _
    %p36 = scmp.eq.s32.totalorder 0, 0
    // Predicated region
    $region18: #{tpu_custom_call.1} parent=1 // pred_check
      %p37 = pneg %p36
    $region19: #{tpu_custom_call.1} parent=1 // pred_check_branch
      %39 = sbr.rel (%p37) target = $region21
    $region20: #{tpu_custom_call.1} parent=1 // pred_region
      %s40 = scalar_lea.smem [#allocation2], 0
      %41 = sst [smem:[%s40]] 0.0
    $region21: #{tpu_custom_call.1} parent=1 // pred_fallthru
      _
    %v42 = vld [vmem:[#allocation3] sm:$0xff]
    %v43 = vld [vmem:[#allocation6] sm:$0xff]
    %s44 = smul.u32 0, 8
    %v45 = vlaneseq
    %v46 = vshrl.u32 %v45, 7
    %v47 = vstv %s44
    %v48 = vadd.s32 %v47, %v46
    %v49 = vlaneseq
    %v50 = vand.u32 %v49, 127
    %vm51 = vcmp.lt.s32.totalorder %v48, 8
    %vm52 = vcmp.lt.s32.totalorder %v50, 32
    %vm53 = vmand %vm51, %vm52
    %54 = vadd.xlane.f32.xlu0 %v43
    %v55 = vpop.xlane.xlu0 %54
    %v56 = vsel %vm51, %v55, 1.0
    %v57 = vrcp.pop %v56
    %v58 = vmul.f32 %v43, %v57
    %v59 = vlog2.pop %v42
    %v60 = vmul.f32 %v59, 0.6931472
    %v61 = vmax.f32 %v60, -100.0
    %v62 = vsub.f32 1.0, %v42
    %v63 = vlog2.pop %v62
    %v64 = vmul.f32 %v63, 0.6931472
    %v65 = vmax.f32 %v64, -100.0
    %v66 = vsub.f32 %v61, %v65
    %v67 = vmul.f32 %v58, %v66
    %v68 = vadd.f32 %v67, %v65
    %v69 = vsub.f32 0.0, %v68
    %v70 = vsel %vm53, %v69, 0.0
    %s71 = sld [smem:[#allocation2]]
    %72 = vadd.xlane.f32.xlu0 %v70
    %v73 = vpop.xlane.xlu0 %72
    %v74 = vrot.slane %v73, 4
    %v75 = vadd.f32 %v73, %v74
    %v76 = vrot.slane %v75, 2
    %v77 = vadd.f32 %v75, %v76
    %v78 = vrot.slane %v77, 1
    %v79 = vadd.f32 %v77, %v78
    %s80 = vtos %v79
    %s81 = sadd.f32 %s71, %s80
    %s82 = scalar_lea.smem [#allocation2], 0
    %83 = sst [smem:[%s82]] %s81
    // Predicated region
    $region22: #{tpu_custom_call.1} parent=1 // pred_check
      %p84 = pneg %p36
    $region23: #{tpu_custom_call.1} parent=1 // pred_check_branch
      %86 = sbr.rel (%p84) target = $region25
    $region24: #{tpu_custom_call.1} parent=1 // pred_region
      %s87 = sld [smem:[#allocation2]]
      %s88 = smul.f32 %s87, 0.00390625
      %s89 = scalar_lea.smem [#allocation8], 0
      %90 = sst [smem:[%s89]] %s88
    $region25: #{tpu_custom_call.1} parent=1 // pred_fallthru
      _
    // Predicated region
    $region26: #{tpu_custom_call.1} parent=1 // pred_check
      _
    $region27: #{tpu_custom_call.1} parent=1 // pred_check_branch
      %92 = sbr.rel (0) target = $region29
    $region28: #{tpu_custom_call.1} parent=1 // pred_region
      %s94 = ssub.s32 16, 16
      %95 = vsyncadd [#allocation5], %s94
      %98 = dma.smem_to_hbm [#allocation8], 16, %s2, [#allocation5]
    $region29: #{tpu_custom_call.1} parent=1 // pred_fallthru
      _
    // Predicated region
    $region30: #{tpu_custom_call.1} parent=1 // pred_check
      _
    $region31: #{tpu_custom_call.1} parent=1 // pred_check_branch
      %100 = sbr.rel (0) target = $region33
    $region32: #{tpu_custom_call.1} parent=1 // pred_region
      %101 = dma.done [#allocation5], 16
    $region33: #{tpu_custom_call.1} parent=1 // pred_fallthru
      _
    %102 = sfence
    %103 = vsyncpa [#allocation4], 1
    %104 = vsyncpa [#allocation7], 1
    %105 = vsyncpa [#allocation5], 1

</llo_original>
